<compile_context>
chip_gen: v5e
topology: v5e:2x2
jax: 0.10.0
libtpu: 0.0.40
codegen_flags: <defaults>
</compile_context>

<pallas_src>
import jax
import jax.numpy as jnp
import numpy as np
from jax.experimental import pallas as pl
from jax.experimental.pallas import tpu as pltpu


def _round_up(n, m):
    return ((n + m - 1) // m) * m


# ---------------------------------------------------------------------------
# Kernel: fused 3-layer MLP on one lane-dense batch tile.
# ---------------------------------------------------------------------------
def _mlp_kernel(x_ref, w1_ref, b1_ref, w2_ref, b2_ref, w3_ref, b3_ref, o_ref):
    dot_dt = w1_ref.dtype                      # bf16 (default) or f32
    x = x_ref[...].astype(dot_dt)              # (tile_g, C*g)
    # head
    h = jnp.dot(x, w1_ref[...], preferred_element_type=jnp.float32) + b1_ref[...]
    # hidden0(relu(h))
    h = jnp.maximum(h, 0.0).astype(dot_dt)
    h = jnp.dot(h, w2_ref[...], preferred_element_type=jnp.float32) + b2_ref[...]
    # hidden1(relu(h))
    h = jnp.maximum(h, 0.0).astype(dot_dt)
    h = jnp.dot(h, w3_ref[...], preferred_element_type=jnp.float32) + b3_ref[...]
    o_ref[...] = h.astype(o_ref.dtype)         # (tile_g, out_dim*g), lane-dense


# ---------------------------------------------------------------------------
# Wrapper helpers
# ---------------------------------------------------------------------------
def _plan_grid(n_group_rows, lanes_in, lanes_out, xo_bytes_per_buffer=4 << 20):
    """Pick (tile_g, n_tiles, g_pad): near-equal grouped-row tiles (multiples
    of 8) sized so one double-buffered x+out buffer is ~xo_bytes_per_buffer,
    using lane-padding-aware byte accounting.  Forces >=2 grid steps when
    there is enough work so ("parallel",) spans both v7x TensorCores."""
    g8 = _round_up(max(n_group_rows, 8), 8)
    row_bytes = 4 * _round_up(lanes_in, 128) + 4 * _round_up(lanes_out, 128)
    cap = max(8, (xo_bytes_per_buffer // row_bytes) // 8 * 8)
    n_tiles = pl.cdiv(g8, cap)
    if n_tiles == 1 and g8 >= 16:
        n_tiles = 2
    tile_g = _round_up(pl.cdiv(g8, n_tiles), 8)
    return tile_g, n_tiles, tile_g * n_tiles


def pack_params(params, group, dot_dtype):
    """Block-diagonal weight packing (kron(I_g, W)) + column-tiled biases."""
    eye = jnp.eye(group, dtype=jnp.float32)
    packed = {}
    for i in (1, 2, 3):
        w = params[f"w{i}"]                                  # (in, out), f32
        b = params[f"b{i}"].reshape(1, -1)                   # (1, out),  f32
        packed[f"w{i}"] = jnp.kron(eye, w).astype(dot_dtype)  # (g*in, g*out)
        packed[f"b{i}"] = jnp.tile(b, (1, group)).astype(jnp.float32)
    return packed


def baseline_forward(x, params, *, dot_dtype=jnp.bfloat16, group=None):
    """x: (B, in_channel) f32; params: w1,b1,w2,b2,w3,b3 in [in,out] layout."""
    B, in_channel = x.shape
    out_dim = params["w3"].shape[1]

    if group is None:
        group = max(1, pl.cdiv(128, out_dim))                 # lane-dense output
        group = min(group, max(1, 4096 // max(in_channel, 1)))  # cap grouped width

    pk = pack_params(params, group, dot_dtype)
    lanes_in = in_channel * group
    lanes_out = out_dim * group

    n_group_rows = pl.cdiv(B, group)
    tile_g, n_tiles, g_pad = _plan_grid(n_group_rows, lanes_in, lanes_out)

    b_pad = g_pad * group
    if b_pad != B:
        x = jnp.pad(x, ((0, b_pad - B), (0, 0)))
    xg = x.reshape(g_pad, lanes_in)          # free, contiguous row-grouping

    def resident(arr):
        # Full-array block, same block index every grid step -> stays in VMEM.
        return pl.BlockSpec(arr.shape, lambda i: (0, 0))

    out = pl.pallas_call(
        _mlp_kernel,
        out_shape=jax.ShapeDtypeStruct((g_pad, lanes_out), jnp.float32),
        grid=(n_tiles,),
        in_specs=[
            pl.BlockSpec((tile_g, lanes_in), lambda i: (i, 0)),   # x: tiled over batch groups
            resident(pk["w1"]), resident(pk["b1"]),
            resident(pk["w2"]), resident(pk["b2"]),
            resident(pk["w3"]), resident(pk["b3"]),
        ],
        out_specs=pl.BlockSpec((tile_g, lanes_out), lambda i: (i, 0)),
        compiler_params=pltpu.CompilerParams(
            dimension_semantics=("parallel",),
            vmem_limit_bytes=32 * 1024 * 1024),
    )(xg, pk["w1"], pk["b1"], pk["w2"], pk["b2"], pk["w3"], pk["b3"])

    # Lane-dense slab -> (B, out_dim): free, contiguous reshape.
    return out.reshape(b_pad, out_dim)[:B]


# ---------------------------------------------------------------------------
# Parameter init (matches the PyTorch module: Xavier-uniform weights, zero bias)
# ---------------------------------------------------------------------------
def _xavier_uniform(key, fan_in, fan_out):
    bound = float(np.sqrt(6.0 / (fan_in + fan_out)))
    w = jax.random.uniform(key, (fan_out, fan_in), jnp.float32, -bound, bound)
    return w.T                                  # stored as (in, out) for the kernel


def init_params(key, in_channel, random_bias=False):
    k1, k2, k3, kb = jax.random.split(key, 4)
    dims = [(in_channel, 4), (4, 8), (8, 4)]
    ws = [_xavier_uniform(k, fi, fo) for k, (fi, fo) in zip((k1, k2, k3), dims)]
    if random_bias:
        kb1, kb2, kb3 = jax.random.split(kb, 3)
        bs = [0.1 * jax.random.normal(k, (1, fo), jnp.float32)
              for k, (_, fo) in zip((kb1, kb2, kb3), dims)]
    else:
        bs = [jnp.zeros((1, fo), jnp.float32) for _, fo in dims]
    return {"w1": ws[0], "b1": bs[0],
            "w2": ws[1], "b2": bs[1],
            "w3": ws[2], "b3": bs[2]}


def _reference(x, p, dot_dtype=jnp.float32):
    def layer(h, w, b):
        return jnp.dot(h.astype(dot_dtype), w.astype(dot_dtype),
                       preferred_element_type=jnp.float32) + b
    h = layer(x, p["w1"], p["b1"])
    h = layer(jnp.maximum(h, 0.0), p["w2"], p["b2"])
    h = layer(jnp.maximum(h, 0.0), p["w3"], p["b3"])
    return h


if __name__ == "__main__":
    key = jax.random.PRNGKey(0)
    k_x, k_p, k_x2 = jax.random.split(key, 3)

    in_channel = 32
    # Non-zero biases so the bias-packing path is actually exercised.
    params = init_params(k_p, in_channel, random_bias=True)

    # --- exactness check: f32 MXU dots, tiny batch (single tile) ---
    batch = 8
    x = jax.random.normal(k_x, (batch, in_channel), jnp.float32)
    out_f32 = jax.block_until_ready(
        baseline_forward(x, params, dot_dtype=jnp.float32))
    ref = _reference(x, params)
    assert out_f32.shape == (batch, 4)
    np.testing.assert_allclose(np.asarray(out_f32), np.asarray(ref),
                               rtol=1e-5, atol=1e-5)

    # --- default (bf16 MXU) path; batch not a multiple of group/tile,
    #     exercises padding + a 2-step grid ---
    batch2 = 1003
    x2 = jax.random.normal(k_x2, (batch2, in_channel), jnp.float32)
    out_bf16 = jax.block_until_ready(baseline_forward(x2, params))
    assert out_bf16.shape == (batch2, 4)
    # Tight check against a reference that casts dot operands to bf16 the same way.
    ref_bf16 = _reference(x2, params, dot_dtype=jnp.bfloat16)
    np.testing.assert_allclose(np.asarray(out_bf16), np.asarray(ref_bf16),
                               rtol=1e-4, atol=1e-4)
    # Loose sanity check against the pure-f32 reference (bf16 MXU numerics).
    ref_f32 = _reference(x2, params)
    np.testing.assert_allclose(np.asarray(out_bf16), np.asarray(ref_f32),
                               rtol=5e-2, atol=1e-1)

    print("KERNEL_OK")
</pallas_src>

<mosaic_0001>
module attributes {stable_mosaic.version = 11 : i64} {
  func.func @_mlp_kernel(%arg0: i32, %arg1: memref<8x1024xf32, #tpu.memory_space<vmem>>, %arg2: memref<1024x128xf32, #tpu.memory_space<vmem>>, %arg3: memref<1x128xf32, #tpu.memory_space<vmem>>, %arg4: memref<128x256xf32, #tpu.memory_space<vmem>>, %arg5: memref<1x256xf32, #tpu.memory_space<vmem>>, %arg6: memref<256x128xf32, #tpu.memory_space<vmem>>, %arg7: memref<1x128xf32, #tpu.memory_space<vmem>>, %arg8: memref<8x128xf32, #tpu.memory_space<vmem>>) attributes {dimension_semantics = [#tpu.dimension_semantics<parallel>], iteration_bounds = array<i64: 1>, scalar_prefetch = 0 : i64, scratch_operands = 0 : i64, tpu.core_type = #tpu.core_type<tc>, window_params = [{transform_indices = @transform_0, window_bounds = array<i64: 8, 1024>}, {pipeline_mode = #tpu.pipeline_mode<synchronous>, transform_indices = @transform_1, window_bounds = array<i64: 1024, 128>}, {pipeline_mode = #tpu.pipeline_mode<synchronous>, transform_indices = @transform_2, window_bounds = array<i64: 1, 128>}, {pipeline_mode = #tpu.pipeline_mode<synchronous>, transform_indices = @transform_3, window_bounds = array<i64: 128, 256>}, {pipeline_mode = #tpu.pipeline_mode<synchronous>, transform_indices = @transform_4, window_bounds = array<i64: 1, 256>}, {pipeline_mode = #tpu.pipeline_mode<synchronous>, transform_indices = @transform_5, window_bounds = array<i64: 256, 128>}, {pipeline_mode = #tpu.pipeline_mode<synchronous>, transform_indices = @transform_6, window_bounds = array<i64: 1, 128>}, {transform_indices = @transform_7, window_bounds = array<i64: 8, 128>}]} {
    %c0 = arith.constant 0 : index
    %c0_0 = arith.constant 0 : index
    %0 = vector.load %arg1[%c0, %c0_0] : memref<8x1024xf32, #tpu.memory_space<vmem>>, vector<8x1024xf32>
    %c0_1 = arith.constant 0 : index
    %c0_2 = arith.constant 0 : index
    %1 = vector.load %arg2[%c0_1, %c0_2] : memref<1024x128xf32, #tpu.memory_space<vmem>>, vector<1024x128xf32>
    %cst = arith.constant dense<0.000000e+00> : vector<8x128xf32>
    %2 = tpu.matmul %0, %1, %cst {dimension_numbers = #tpu.dot_dimension_numbers<[1], [0], [0], [1], [0, 0, 1, 1], [], []>} : vector<8x1024xf32>, vector<1024x128xf32>, vector<8x128xf32> -> vector<8x128xf32>
    %c0_3 = arith.constant 0 : index
    %c0_4 = arith.constant 0 : index
    %3 = vector.load %arg3[%c0_3, %c0_4] : memref<1x128xf32, #tpu.memory_space<vmem>>, vector<1x128xf32>
    %4 = vector.broadcast %3 : vector<1x128xf32> to vector<8x128xf32>
    %5 = arith.addf %2, %4 : vector<8x128xf32>
    %cst_5 = arith.constant 0.000000e+00 : f32
    %6 = vector.broadcast %cst_5 : f32 to vector<8x128xf32>
    %7 = arith.maximumf %5, %6 : vector<8x128xf32>
    %c0_6 = arith.constant 0 : index
    %c0_7 = arith.constant 0 : index
    %8 = vector.load %arg4[%c0_6, %c0_7] : memref<128x256xf32, #tpu.memory_space<vmem>>, vector<128x256xf32>
    %cst_8 = arith.constant dense<0.000000e+00> : vector<8x256xf32>
    %9 = tpu.matmul %7, %8, %cst_8 {dimension_numbers = #tpu.dot_dimension_numbers<[1], [0], [0], [1], [0, 0, 1, 1], [], []>} : vector<8x128xf32>, vector<128x256xf32>, vector<8x256xf32> -> vector<8x256xf32>
    %c0_9 = arith.constant 0 : index
    %c0_10 = arith.constant 0 : index
    %10 = vector.load %arg5[%c0_9, %c0_10] : memref<1x256xf32, #tpu.memory_space<vmem>>, vector<1x256xf32>
    %11 = vector.broadcast %10 : vector<1x256xf32> to vector<8x256xf32>
    %12 = arith.addf %9, %11 : vector<8x256xf32>
    %cst_11 = arith.constant 0.000000e+00 : f32
    %13 = vector.broadcast %cst_11 : f32 to vector<8x256xf32>
    %14 = arith.maximumf %12, %13 : vector<8x256xf32>
    %c0_12 = arith.constant 0 : index
    %c0_13 = arith.constant 0 : index
    %15 = vector.load %arg6[%c0_12, %c0_13] : memref<256x128xf32, #tpu.memory_space<vmem>>, vector<256x128xf32>
    %cst_14 = arith.constant dense<0.000000e+00> : vector<8x128xf32>
    %16 = tpu.matmul %14, %15, %cst_14 {dimension_numbers = #tpu.dot_dimension_numbers<[1], [0], [0], [1], [0, 0, 1, 1], [], []>} : vector<8x256xf32>, vector<256x128xf32>, vector<8x128xf32> -> vector<8x128xf32>
    %c0_15 = arith.constant 0 : index
    %c0_16 = arith.constant 0 : index
    %17 = vector.load %arg7[%c0_15, %c0_16] : memref<1x128xf32, #tpu.memory_space<vmem>>, vector<1x128xf32>
    %18 = vector.broadcast %17 : vector<1x128xf32> to vector<8x128xf32>
    %19 = arith.addf %16, %18 : vector<8x128xf32>
    %c0_17 = arith.constant 0 : index
    %c0_18 = arith.constant 0 : index
    %20 = vector.load %arg8[%c0_17, %c0_18] : memref<8x128xf32, #tpu.memory_space<vmem>>, vector<8x128xf32>
    tpu.vector_store %arg8[%c0_17, %c0_18], %19 {strides = array<i32>} : memref<8x128xf32, #tpu.memory_space<vmem>>, vector<8x128xf32>,
    return
  }
  func.func @transform_0(%arg0: i32) -> (i32, i32) {
    %c0_i32 = arith.constant 0 : i32
    %c0_i32_0 = arith.constant 0 : i32
    return %arg0, %c0_i32 : i32, i32
  }
  func.func @transform_1(%arg0: i32) -> (i32, i32) {
    %c0_i32 = arith.constant 0 : i32
    %c0_i32_0 = arith.constant 0 : i32
    %c0_i32_1 = arith.constant 0 : i32
    return %c0_i32, %c0_i32_0 : i32, i32
  }
  func.func @transform_2(%arg0: i32) -> (i32, i32) {
    %c0_i32 = arith.constant 0 : i32
    %c0_i32_0 = arith.constant 0 : i32
    %c0_i32_1 = arith.constant 0 : i32
    return %c0_i32, %c0_i32_0 : i32, i32
  }
  func.func @transform_3(%arg0: i32) -> (i32, i32) {
    %c0_i32 = arith.constant 0 : i32
    %c0_i32_0 = arith.constant 0 : i32
    %c0_i32_1 = arith.constant 0 : i32
    return %c0_i32, %c0_i32_0 : i32, i32
  }
  func.func @transform_4(%arg0: i32) -> (i32, i32) {
    %c0_i32 = arith.constant 0 : i32
    %c0_i32_0 = arith.constant 0 : i32
    %c0_i32_1 = arith.constant 0 : i32
    return %c0_i32, %c0_i32_0 : i32, i32
  }
  func.func @transform_5(%arg0: i32) -> (i32, i32) {
    %c0_i32 = arith.constant 0 : i32
    %c0_i32_0 = arith.constant 0 : i32
    %c0_i32_1 = arith.constant 0 : i32
    return %c0_i32, %c0_i32_0 : i32, i32
  }
  func.func @transform_6(%arg0: i32) -> (i32, i32) {
    %c0_i32 = arith.constant 0 : i32
    %c0_i32_0 = arith.constant 0 : i32
    %c0_i32_1 = arith.constant 0 : i32
    return %c0_i32, %c0_i32_0 : i32, i32
  }
  func.func @transform_7(%arg0: i32) -> (i32, i32) {
    %c0_i32 = arith.constant 0 : i32
    %c0_i32_0 = arith.constant 0 : i32
    return %arg0, %c0_i32 : i32, i32
  }
}

</mosaic_0001>

<llo_original>
// kernel: tpu_custom_call.1
$region0: #{tpu_custom_call.1}
  #allocation0 [shape = 'u32[]', space=smem, size = 0x4, offset = 0x4, fixed_abs, tag = 'smem constant byte address 0x4 - core index']
  #allocation1 [shape = 'u32[72,128]{1,0:T(1,128)}', space=vmem, size = 0x9000, scoped, tag = 'internal scratch']
  %s0 = inlined_call_operand.hbm [shape: f32[8,1024], index: 0, kind: input, shape index: {}]
  %s1 = inlined_call_operand.hbm [shape: f32[1024,128], index: 1, kind: input, shape index: {}]
  %s2 = inlined_call_operand.vmem [shape: f32[1,128], index: 2, kind: input, shape index: {}]
  %s3 = inlined_call_operand.hbm [shape: f32[128,256], index: 3, kind: input, shape index: {}]
  %s4 = inlined_call_operand.vmem [shape: f32[1,256], index: 4, kind: input, shape index: {}]
  %s5 = inlined_call_operand.hbm [shape: f32[256,128], index: 5, kind: input, shape index: {}]
  %s6 = inlined_call_operand.vmem [shape: f32[1,128], index: 6, kind: input, shape index: {}]
  %s7 = inlined_call_operand.hbm [shape: f32[8,128], index: 7, kind: output, shape index: {}]
  %s8 = sld [smem:[#allocation0]]
  $region54: #{tpu_custom_call.1} parent=0
    _
  %s10 = ssub.s32 1, %s8
  %s11 = scalar_select 0, %s10, %s8
  $region1: #{tpu_custom_call.1} parent=0
    #allocation2 [shape = 'u8[32768]{0}', space=vmem, size = 0x8000, scoped, tag = 'input window, operand 0, single buffered']
    #allocation3 [shape = 's32[1]{0}', space=sflag, size = 0x4, scoped, tag = 'scoped memory for tpu_custom_call.1']
    #allocation4 [shape = 's32[1]{0}', space=sflag, size = 0x4, scoped, tag = 'scoped memory for tpu_custom_call.1']
    #allocation5 [shape = 'u8[524288]{0}', space=vmem, size = 0x80000, scoped, tag = 'input window, operand 1, single buffered']
    #allocation6 [shape = 's32[1]{0}', space=sflag, size = 0x4, scoped, tag = 'scoped memory for tpu_custom_call.1']
    #allocation7 [shape = 'u8[131072]{0}', space=vmem, size = 0x20000, scoped, tag = 'input window, operand 3, single buffered']
    #allocation8 [shape = 'u8[131072]{0}', space=vmem, size = 0x20000, scoped, tag = 'input window, operand 5, single buffered']
    #allocation9 [shape = 's32[1]{0}', space=sflag, size = 0x4, scoped, tag = 'scoped memory for tpu_custom_call.1']
    #allocation10 [shape = 'u8[4096]{0}', space=vmem, size = 0x1000, scoped, tag = 'output window, operand 0, single buffered']
    %12 = vsyncpa [#allocation3], 0
    %13 = vsyncpa [#allocation6], 0
    %14 = vsyncpa [#allocation9], 0
    %15 = vsyncpa [#allocation4], 0
    // Predicated region
    $region2: #{tpu_custom_call.1} parent=1 // pred_check
      _
    $region3: #{tpu_custom_call.1} parent=1 // pred_check_branch
      %17 = sbr.rel (0) target = $region5
    $region4: #{tpu_custom_call.1} parent=1 // pred_region
      %19 = vsyncadd [#allocation3], 0
      %s21 = sshll.u32 %s0, 4
      %s22 = int_to_ptr.hbm [resolvable:$true] %s21
      %s23 = sshll.u32 [#allocation2], 4
      %s24 = int_to_ptr.vmem [resolvable:$true] %s23
      %26 = dma.hbm_to_vmem [thread:$0]  %s22, 1024, %s24, [#allocation3]
    $region5: #{tpu_custom_call.1} parent=1 // pred_fallthru
      _
    // Predicated region
    $region6: #{tpu_custom_call.1} parent=1 // pred_check
      _
    $region7: #{tpu_custom_call.1} parent=1 // pred_check_branch
      %28 = sbr.rel (0) target = $region9
    $region8: #{tpu_custom_call.1} parent=1 // pred_region
      %30 = vsyncadd [#allocation6], 0
      %s31 = sshll.u32 %s1, 4
      %s32 = int_to_ptr.hbm [resolvable:$true] %s31
      %s33 = sshll.u32 [#allocation5], 4
      %s34 = int_to_ptr.vmem [resolvable:$true] %s33
      %39 = dma.hbm_to_vmem [thread:$0]  %s32, 16384, %s34, [#allocation6], 128, 128, 8
    $region9: #{tpu_custom_call.1} parent=1 // pred_fallthru
      _
    // Predicated region
    $region10: #{tpu_custom_call.1} parent=1 // pred_check
      _
    $region11: #{tpu_custom_call.1} parent=1 // pred_check_branch
      %41 = sbr.rel (0) target = $region13
    $region12: #{tpu_custom_call.1} parent=1 // pred_region
      _
    $region13: #{tpu_custom_call.1} parent=1 // pred_fallthru
      _
    // Predicated region
    $region14: #{tpu_custom_call.1} parent=1 // pred_check
      _
    $region15: #{tpu_custom_call.1} parent=1 // pred_check_branch
      %43 = sbr.rel (0) target = $region17
    $region16: #{tpu_custom_call.1} parent=1 // pred_region
      %45 = vsyncadd [#allocation6], 0
      %s46 = sshll.u32 %s3, 4
      %s47 = int_to_ptr.hbm [resolvable:$true] %s46
      %s48 = sshll.u32 [#allocation7], 4
      %s49 = int_to_ptr.vmem [resolvable:$true] %s48
      %54 = dma.hbm_to_vmem [thread:$0]  %s47, 4096, %s49, [#allocation6], 256, 256, 16
    $region17: #{tpu_custom_call.1} parent=1 // pred_fallthru
      _
    // Predicated region
    $region18: #{tpu_custom_call.1} parent=1 // pred_check
      _
    $region19: #{tpu_custom_call.1} parent=1 // pred_check_branch
      %56 = sbr.rel (0) target = $region21
    $region20: #{tpu_custom_call.1} parent=1 // pred_region
      _
    $region21: #{tpu_custom_call.1} parent=1 // pred_fallthru
      _
    // Predicated region
    $region22: #{tpu_custom_call.1} parent=1 // pred_check
      _
    $region23: #{tpu_custom_call.1} parent=1 // pred_check_branch
      %58 = sbr.rel (0) target = $region25
    $region24: #{tpu_custom_call.1} parent=1 // pred_region
      %60 = vsyncadd [#allocation9], 0
      %s61 = sshll.u32 %s5, 4
      %s62 = int_to_ptr.hbm [resolvable:$true] %s61
      %s63 = sshll.u32 [#allocation8], 4
      %s64 = int_to_ptr.vmem [resolvable:$true] %s63
      %69 = dma.hbm_to_vmem [thread:$0]  %s62, 4096, %s64, [#allocation9], 128, 128, 8
    $region25: #{tpu_custom_call.1} parent=1 // pred_fallthru
      _
    // Predicated region
    $region26: #{tpu_custom_call.1} parent=1 // pred_check
      _
    $region27: #{tpu_custom_call.1} parent=1 // pred_check_branch
      %71 = sbr.rel (0) target = $region29
    $region28: #{tpu_custom_call.1} parent=1 // pred_region
      _
    $region29: #{tpu_custom_call.1} parent=1 // pred_fallthru
      _
    // Predicated region
    $region30: #{tpu_custom_call.1} parent=1 // pred_check
      _
    $region31: #{tpu_custom_call.1} parent=1 // pred_check_branch
      %73 = sbr.rel (0) target = $region33
    $region32: #{tpu_custom_call.1} parent=1 // pred_region
      %75 = dma.done [#allocation3], 1024
    $region33: #{tpu_custom_call.1} parent=1 // pred_fallthru
      _
    // Predicated region
    $region34: #{tpu_custom_call.1} parent=1 // pred_check
      _
    $region35: #{tpu_custom_call.1} parent=1 // pred_check_branch
      %77 = sbr.rel (0) target = $region37
    $region36: #{tpu_custom_call.1} parent=1 // pred_region
      %79 = dma.done [#allocation6], 16384
    $region37: #{tpu_custom_call.1} parent=1 // pred_fallthru
      _
    // Predicated region
    $region38: #{tpu_custom_call.1} parent=1 // pred_check
      _
    $region39: #{tpu_custom_call.1} parent=1 // pred_check_branch
      %81 = sbr.rel (0) target = $region41
    $region40: #{tpu_custom_call.1} parent=1 // pred_region
      %83 = dma.done [#allocation6], 4096
    $region41: #{tpu_custom_call.1} parent=1 // pred_fallthru
      _
    // Predicated region
    $region42: #{tpu_custom_call.1} parent=1 // pred_check
      _
    $region43: #{tpu_custom_call.1} parent=1 // pred_check_branch
      %85 = sbr.rel (0) target = $region45
    $region44: #{tpu_custom_call.1} parent=1 // pred_region
      %87 = dma.done [#allocation9], 4096
    $region45: #{tpu_custom_call.1} parent=1 // pred_fallthru
      _
    %v88 = vld [vmem:[#allocation2] sm:$0xff]
    %v89 = vld [vmem:[#allocation2 + $0x8] sm:$0xff]
    %v90 = vld [vmem:[#allocation2 + $0x10] sm:$0xff]
    %v91 = vld [vmem:[#allocation2 + $0x18] sm:$0xff]
    %v92 = vld [vmem:[#allocation2 + $0x20] sm:$0xff]
    %v93 = vld [vmem:[#allocation2 + $0x28] sm:$0xff]
    %v94 = vld [vmem:[#allocation2 + $0x30] sm:$0xff]
    %v95 = vld [vmem:[#allocation2 + $0x38] sm:$0xff]
    %v96 = vld [vmem:[#allocation5] sm:$0xff]
    %v97 = vld [vmem:[#allocation5 + $0x8] sm:$0xff]
    %v98 = vld [vmem:[#allocation5 + $0x10] sm:$0xff]
    %v99 = vld [vmem:[#allocation5 + $0x18] sm:$0xff]
    %v100 = vld [vmem:[#allocation5 + $0x20] sm:$0xff]
    %v101 = vld [vmem:[#allocation5 + $0x28] sm:$0xff]
    %v102 = vld [vmem:[#allocation5 + $0x30] sm:$0xff]
    %v103 = vld [vmem:[#allocation5 + $0x38] sm:$0xff]
    %v104 = vld [vmem:[#allocation5 + $0x40] sm:$0xff]
    %v105 = vld [vmem:[#allocation5 + $0x48] sm:$0xff]
    %v106 = vld [vmem:[#allocation5 + $0x50] sm:$0xff]
    %v107 = vld [vmem:[#allocation5 + $0x58] sm:$0xff]
    %v108 = vld [vmem:[#allocation5 + $0x60] sm:$0xff]
    %v109 = vld [vmem:[#allocation5 + $0x68] sm:$0xff]
    %v110 = vld [vmem:[#allocation5 + $0x70] sm:$0xff]
    %v111 = vld [vmem:[#allocation5 + $0x78] sm:$0xff]
    %v112 = vld [vmem:[#allocation5 + $0x80] sm:$0xff]
    %v113 = vld [vmem:[#allocation5 + $0x88] sm:$0xff]
    %v114 = vld [vmem:[#allocation5 + $0x90] sm:$0xff]
    %v115 = vld [vmem:[#allocation5 + $0x98] sm:$0xff]
    %v116 = vld [vmem:[#allocation5 + $0xa0] sm:$0xff]
    %v117 = vld [vmem:[#allocation5 + $0xa8] sm:$0xff]
    %v118 = vld [vmem:[#allocation5 + $0xb0] sm:$0xff]
    %v119 = vld [vmem:[#allocation5 + $0xb8] sm:$0xff]
    %v120 = vld [vmem:[#allocation5 + $0xc0] sm:$0xff]
    %v121 = vld [vmem:[#allocation5 + $0xc8] sm:$0xff]
    %v122 = vld [vmem:[#allocation5 + $0xd0] sm:$0xff]
    %v123 = vld [vmem:[#allocation5 + $0xd8] sm:$0xff]
    %v124 = vld [vmem:[#allocation5 + $0xe0] sm:$0xff]
    %v125 = vld [vmem:[#allocation5 + $0xe8] sm:$0xff]
    %v126 = vld [vmem:[#allocation5 + $0xf0] sm:$0xff]
    %v127 = vld [vmem:[#allocation5 + $0xf8] sm:$0xff]
    %v128 = vld [vmem:[#allocation5 + $0x100] sm:$0xff]
    %v129 = vld [vmem:[#allocation5 + $0x108] sm:$0xff]
    %v130 = vld [vmem:[#allocation5 + $0x110] sm:$0xff]
    %v131 = vld [vmem:[#allocation5 + $0x118] sm:$0xff]
    %v132 = vld [vmem:[#allocation5 + $0x120] sm:$0xff]
    %v133 = vld [vmem:[#allocation5 + $0x128] sm:$0xff]
    %v134 = vld [vmem:[#allocation5 + $0x130] sm:$0xff]
    %v135 = vld [vmem:[#allocation5 + $0x138] sm:$0xff]
    %v136 = vld [vmem:[#allocation5 + $0x140] sm:$0xff]
    %v137 = vld [vmem:[#allocation5 + $0x148] sm:$0xff]
    %v138 = vld [vmem:[#allocation5 + $0x150] sm:$0xff]
    %v139 = vld [vmem:[#allocation5 + $0x158] sm:$0xff]
    %v140 = vld [vmem:[#allocation5 + $0x160] sm:$0xff]
    %v141 = vld [vmem:[#allocation5 + $0x168] sm:$0xff]
    %v142 = vld [vmem:[#allocation5 + $0x170] sm:$0xff]
    %v143 = vld [vmem:[#allocation5 + $0x178] sm:$0xff]
    %v144 = vld [vmem:[#allocation5 + $0x180] sm:$0xff]
    %v145 = vld [vmem:[#allocation5 + $0x188] sm:$0xff]
    %v146 = vld [vmem:[#allocation5 + $0x190] sm:$0xff]
    %v147 = vld [vmem:[#allocation5 + $0x198] sm:$0xff]
    %v148 = vld [vmem:[#allocation5 + $0x1a0] sm:$0xff]
    %v149 = vld [vmem:[#allocation5 + $0x1a8] sm:$0xff]
    %v150 = vld [vmem:[#allocation5 + $0x1b0] sm:$0xff]
    %v151 = vld [vmem:[#allocation5 + $0x1b8] sm:$0xff]
    %v152 = vld [vmem:[#allocation5 + $0x1c0] sm:$0xff]
    %v153 = vld [vmem:[#allocation5 + $0x1c8] sm:$0xff]
    %v154 = vld [vmem:[#allocation5 + $0x1d0] sm:$0xff]
    %v155 = vld [vmem:[#allocation5 + $0x1d8] sm:$0xff]
    %v156 = vld [vmem:[#allocation5 + $0x1e0] sm:$0xff]
    %v157 = vld [vmem:[#allocation5 + $0x1e8] sm:$0xff]
    %v158 = vld [vmem:[#allocation5 + $0x1f0] sm:$0xff]
    %v159 = vld [vmem:[#allocation5 + $0x1f8] sm:$0xff]
    %v160 = vld [vmem:[#allocation5 + $0x200] sm:$0xff]
    %v161 = vld [vmem:[#allocation5 + $0x208] sm:$0xff]
    %v162 = vld [vmem:[#allocation5 + $0x210] sm:$0xff]
    %v163 = vld [vmem:[#allocation5 + $0x218] sm:$0xff]
    %v164 = vld [vmem:[#allocation5 + $0x220] sm:$0xff]
    %v165 = vld [vmem:[#allocation5 + $0x228] sm:$0xff]
    %v166 = vld [vmem:[#allocation5 + $0x230] sm:$0xff]
    %v167 = vld [vmem:[#allocation5 + $0x238] sm:$0xff]
    %v168 = vld [vmem:[#allocation5 + $0x240] sm:$0xff]
    %v169 = vld [vmem:[#allocation5 + $0x248] sm:$0xff]
    %v170 = vld [vmem:[#allocation5 + $0x250] sm:$0xff]
    %v171 = vld [vmem:[#allocation5 + $0x258] sm:$0xff]
    %v172 = vld [vmem:[#allocation5 + $0x260] sm:$0xff]
    %v173 = vld [vmem:[#allocation5 + $0x268] sm:$0xff]
    %v174 = vld [vmem:[#allocation5 + $0x270] sm:$0xff]
    %v175 = vld [vmem:[#allocation5 + $0x278] sm:$0xff]
    %v176 = vld [vmem:[#allocation5 + $0x280] sm:$0xff]
    %v177 = vld [vmem:[#allocation5 + $0x288] sm:$0xff]
    %v178 = vld [vmem:[#allocation5 + $0x290] sm:$0xff]
    %v179 = vld [vmem:[#allocation5 + $0x298] sm:$0xff]
    %v180 = vld [vmem:[#allocation5 + $0x2a0] sm:$0xff]
    %v181 = vld [vmem:[#allocation5 + $0x2a8] sm:$0xff]
    %v182 = vld [vmem:[#allocation5 + $0x2b0] sm:$0xff]
    %v183 = vld [vmem:[#allocation5 + $0x2b8] sm:$0xff]
    %v184 = vld [vmem:[#allocation5 + $0x2c0] sm:$0xff]
    %v185 = vld [vmem:[#allocation5 + $0x2c8] sm:$0xff]
    %v186 = vld [vmem:[#allocation5 + $0x2d0] sm:$0xff]
    %v187 = vld [vmem:[#allocation5 + $0x2d8] sm:$0xff]
    %v188 = vld [vmem:[#allocation5 + $0x2e0] sm:$0xff]
    %v189 = vld [vmem:[#allocation5 + $0x2e8] sm:$0xff]
    %v190 = vld [vmem:[#allocation5 + $0x2f0] sm:$0xff]
    %v191 = vld [vmem:[#allocation5 + $0x2f8] sm:$0xff]
    %v192 = vld [vmem:[#allocation5 + $0x300] sm:$0xff]
    %v193 = vld [vmem:[#allocation5 + $0x308] sm:$0xff]
    %v194 = vld [vmem:[#allocation5 + $0x310] sm:$0xff]
    %v195 = vld [vmem:[#allocation5 + $0x318] sm:$0xff]
    %v196 = vld [vmem:[#allocation5 + $0x320] sm:$0xff]
    %v197 = vld [vmem:[#allocation5 + $0x328] sm:$0xff]
    %v198 = vld [vmem:[#allocation5 + $0x330] sm:$0xff]
    %v199 = vld [vmem:[#allocation5 + $0x338] sm:$0xff]
    %v200 = vld [vmem:[#allocation5 + $0x340] sm:$0xff]
    %v201 = vld [vmem:[#allocation5 + $0x348] sm:$0xff]
    %v202 = vld [vmem:[#allocation5 + $0x350] sm:$0xff]
    %v203 = vld [vmem:[#allocation5 + $0x358] sm:$0xff]
    %v204 = vld [vmem:[#allocation5 + $0x360] sm:$0xff]
    %v205 = vld [vmem:[#allocation5 + $0x368] sm:$0xff]
    %v206 = vld [vmem:[#allocation5 + $0x370] sm:$0xff]
    %v207 = vld [vmem:[#allocation5 + $0x378] sm:$0xff]
    %v208 = vld [vmem:[#allocation5 + $0x380] sm:$0xff]
    %v209 = vld [vmem:[#allocation5 + $0x388] sm:$0xff]
    %v210 = vld [vmem:[#allocation5 + $0x390] sm:$0xff]
    %v211 = vld [vmem:[#allocation5 + $0x398] sm:$0xff]
    %v212 = vld [vmem:[#allocation5 + $0x3a0] sm:$0xff]
    %v213 = vld [vmem:[#allocation5 + $0x3a8] sm:$0xff]
    %v214 = vld [vmem:[#allocation5 + $0x3b0] sm:$0xff]
    %v215 = vld [vmem:[#allocation5 + $0x3b8] sm:$0xff]
    %v216 = vld [vmem:[#allocation5 + $0x3c0] sm:$0xff]
    %v217 = vld [vmem:[#allocation5 + $0x3c8] sm:$0xff]
    %v218 = vld [vmem:[#allocation5 + $0x3d0] sm:$0xff]
    %v219 = vld [vmem:[#allocation5 + $0x3d8] sm:$0xff]
    %v220 = vld [vmem:[#allocation5 + $0x3e0] sm:$0xff]
    %v221 = vld [vmem:[#allocation5 + $0x3e8] sm:$0xff]
    %v222 = vld [vmem:[#allocation5 + $0x3f0] sm:$0xff]
    %v223 = vld [vmem:[#allocation5 + $0x3f8] sm:$0xff]
    %v224 = vld [vmem:[%s2] sm:$0x1]
    %v226 = vperm.slane %v224, 0
    %228 = vmatpush.msra.mxu0 %v111
    %229 = vmatpush.msra.mxu0 %v110
    %230 = vmatpush.msra.mxu0 %v109
    %231 = vmatpush.msra.mxu0 %v108
    %232 = vmatpush.msra.mxu0 %v107
    %233 = vmatpush.msra.mxu0 %v106
    %234 = vmatpush.msra.mxu0 %v105
    %235 = vmatpush.msra.mxu0 %v104
    %236 = vmatpush.msra.mxu0 %v103
    %237 = vmatpush.msra.mxu0 %v102
    %238 = vmatpush.msra.mxu0 %v101
    %239 = vmatpush.msra.mxu0 %v100
    %240 = vmatpush.msra.mxu0 %v99
    %241 = vmatpush.msra.mxu0 %v98
    %242 = vmatpush.msra.mxu0 %v97
    %243 = vmatpush.msra.mxu0 %v96
    %244 = vmatmul.f32.gmra.mxu0 %v88
    %v245 = vpop.f32.mrf.mxu0
    %v246 = vadd.f32 %v226, %v245
    %247 = vdwg.mxu0
    %248 = vmatpush.msra.mxu0 %v127
    %249 = vmatpush.msra.mxu0 %v126
    %250 = vmatpush.msra.mxu0 %v125
    %251 = vmatpush.msra.mxu0 %v124
    %252 = vmatpush.msra.mxu0 %v123
    %253 = vmatpush.msra.mxu0 %v122
    %254 = vmatpush.msra.mxu0 %v121
    %255 = vmatpush.msra.mxu0 %v120
    %256 = vmatpush.msra.mxu0 %v119
    %257 = vmatpush.msra.mxu0 %v118
    %258 = vmatpush.msra.mxu0 %v117
    %259 = vmatpush.msra.mxu0 %v116
    %260 = vmatpush.msra.mxu0 %v115
    %261 = vmatpush.msra.mxu0 %v114
    %262 = vmatpush.msra.mxu0 %v113
    %263 = vmatpush.msra.mxu0 %v112
    %264 = vmatmul.f32.gmra.mxu0 %v89
    %v265 = vpop.f32.mrf.mxu0
    %v266 = vadd.f32 %v246, %v265
    %267 = vdwg.mxu0
    %268 = vmatpush.msra.mxu0 %v143
    %269 = vmatpush.msra.mxu0 %v142
    %270 = vmatpush.msra.mxu0 %v141
    %271 = vmatpush.msra.mxu0 %v140
    %272 = vmatpush.msra.mxu0 %v139
    %273 = vmatpush.msra.mxu0 %v138
    %274 = vmatpush.msra.mxu0 %v137
    %275 = vmatpush.msra.mxu0 %v136
    %276 = vmatpush.msra.mxu0 %v135
    %277 = vmatpush.msra.mxu0 %v134
    %278 = vmatpush.msra.mxu0 %v133
    %279 = vmatpush.msra.mxu0 %v132
    %280 = vmatpush.msra.mxu0 %v131
    %281 = vmatpush.msra.mxu0 %v130
    %282 = vmatpush.msra.mxu0 %v129
    %283 = vmatpush.msra.mxu0 %v128
    %284 = vmatmul.f32.gmra.mxu0 %v90
    %v285 = vpop.f32.mrf.mxu0
    %v286 = vadd.f32 %v266, %v285
    %287 = vdwg.mxu0
    %288 = vmatpush.msra.mxu0 %v159
    %289 = vmatpush.msra.mxu0 %v158
    %290 = vmatpush.msra.mxu0 %v157
    %291 = vmatpush.msra.mxu0 %v156
    %292 = vmatpush.msra.mxu0 %v155
    %293 = vmatpush.msra.mxu0 %v154
    %294 = vmatpush.msra.mxu0 %v153
    %295 = vmatpush.msra.mxu0 %v152
    %296 = vmatpush.msra.mxu0 %v151
    %297 = vmatpush.msra.mxu0 %v150
    %298 = vmatpush.msra.mxu0 %v149
    %299 = vmatpush.msra.mxu0 %v148
    %300 = vmatpush.msra.mxu0 %v147
    %301 = vmatpush.msra.mxu0 %v146
    %302 = vmatpush.msra.mxu0 %v145
    %303 = vmatpush.msra.mxu0 %v144
    %304 = vmatmul.f32.gmra.mxu0 %v91
    %v305 = vpop.f32.mrf.mxu0
    %v306 = vadd.f32 %v286, %v305
    %307 = vdwg.mxu0
    %308 = vmatpush.msra.mxu0 %v175
    %309 = vmatpush.msra.mxu0 %v174
    %310 = vmatpush.msra.mxu0 %v173
    %311 = vmatpush.msra.mxu0 %v172
    %312 = vmatpush.msra.mxu0 %v171
    %313 = vmatpush.msra.mxu0 %v170
    %314 = vmatpush.msra.mxu0 %v169
    %315 = vmatpush.msra.mxu0 %v168
    %316 = vmatpush.msra.mxu0 %v167
    %317 = vmatpush.msra.mxu0 %v166
    %318 = vmatpush.msra.mxu0 %v165
    %319 = vmatpush.msra.mxu0 %v164
    %320 = vmatpush.msra.mxu0 %v163
    %321 = vmatpush.msra.mxu0 %v162
    %322 = vmatpush.msra.mxu0 %v161
    %323 = vmatpush.msra.mxu0 %v160
    %324 = vmatmul.f32.gmra.mxu0 %v92
    %v325 = vpop.f32.mrf.mxu0
    %v326 = vadd.f32 %v306, %v325
    %327 = vdwg.mxu0
    %328 = vmatpush.msra.mxu0 %v191
    %329 = vmatpush.msra.mxu0 %v190
    %330 = vmatpush.msra.mxu0 %v189
    %331 = vmatpush.msra.mxu0 %v188
    %332 = vmatpush.msra.mxu0 %v187
    %333 = vmatpush.msra.mxu0 %v186
    %334 = vmatpush.msra.mxu0 %v185
    %335 = vmatpush.msra.mxu0 %v184
    %336 = vmatpush.msra.mxu0 %v183
    %337 = vmatpush.msra.mxu0 %v182
    %338 = vmatpush.msra.mxu0 %v181
    %339 = vmatpush.msra.mxu0 %v180
    %340 = vmatpush.msra.mxu0 %v179
    %341 = vmatpush.msra.mxu0 %v178
    %342 = vmatpush.msra.mxu0 %v177
    %343 = vmatpush.msra.mxu0 %v176
    %344 = vmatmul.f32.gmra.mxu0 %v93
    %v345 = vpop.f32.mrf.mxu0
    %v346 = vadd.f32 %v326, %v345
    %347 = vdwg.mxu0
    %348 = vmatpush.msra.mxu0 %v207
    %349 = vmatpush.msra.mxu0 %v206
    %350 = vmatpush.msra.mxu0 %v205
    %351 = vmatpush.msra.mxu0 %v204
    %352 = vmatpush.msra.mxu0 %v203
    %353 = vmatpush.msra.mxu0 %v202
    %354 = vmatpush.msra.mxu0 %v201
    %355 = vmatpush.msra.mxu0 %v200
    %356 = vmatpush.msra.mxu0 %v199
    %357 = vmatpush.msra.mxu0 %v198
    %358 = vmatpush.msra.mxu0 %v197
    %359 = vmatpush.msra.mxu0 %v196
    %360 = vmatpush.msra.mxu0 %v195
    %361 = vmatpush.msra.mxu0 %v194
    %362 = vmatpush.msra.mxu0 %v193
    %363 = vmatpush.msra.mxu0 %v192
    %364 = vmatmul.f32.gmra.mxu0 %v94
    %v365 = vpop.f32.mrf.mxu0
    %v366 = vadd.f32 %v346, %v365
    %367 = vdwg.mxu0
    %368 = vmatpush.msra.mxu0 %v223
    %369 = vmatpush.msra.mxu0 %v222
    %370 = vmatpush.msra.mxu0 %v221
    %371 = vmatpush.msra.mxu0 %v220
    %372 = vmatpush.msra.mxu0 %v219
    %373 = vmatpush.msra.mxu0 %v218
    %374 = vmatpush.msra.mxu0 %v217
    %375 = vmatpush.msra.mxu0 %v216
    %376 = vmatpush.msra.mxu0 %v215
    %377 = vmatpush.msra.mxu0 %v214
    %378 = vmatpush.msra.mxu0 %v213
    %379 = vmatpush.msra.mxu0 %v212
    %380 = vmatpush.msra.mxu0 %v211
    %381 = vmatpush.msra.mxu0 %v210
    %382 = vmatpush.msra.mxu0 %v209
    %383 = vmatpush.msra.mxu0 %v208
    %384 = vmatmul.f32.gmra.mxu0 %v95
    %v385 = vpop.f32.mrf.mxu0
    %v386 = vadd.f32 %v366, %v385
    %387 = vdwg.mxu0
    %v388 = vmax.f32 %v386, 0.0
    %v389 = vld [vmem:[#allocation7] sm:$0xff]
    %v390 = vld [vmem:[#allocation7 + $0x8] sm:$0xff]
    %v391 = vld [vmem:[#allocation7 + $0x10] sm:$0xff]
    %v392 = vld [vmem:[#allocation7 + $0x18] sm:$0xff]
    %v393 = vld [vmem:[#allocation7 + $0x20] sm:$0xff]
    %v394 = vld [vmem:[#allocation7 + $0x28] sm:$0xff]
    %v395 = vld [vmem:[#allocation7 + $0x30] sm:$0xff]
    %v396 = vld [vmem:[#allocation7 + $0x38] sm:$0xff]
    %v397 = vld [vmem:[#allocation7 + $0x40] sm:$0xff]
    %v398 = vld [vmem:[#allocation7 + $0x48] sm:$0xff]
    %v399 = vld [vmem:[#allocation7 + $0x50] sm:$0xff]
    %v400 = vld [vmem:[#allocation7 + $0x58] sm:$0xff]
    %v401 = vld [vmem:[#allocation7 + $0x60] sm:$0xff]
    %v402 = vld [vmem:[#allocation7 + $0x68] sm:$0xff]
    %v403 = vld [vmem:[#allocation7 + $0x70] sm:$0xff]
    %v404 = vld [vmem:[#allocation7 + $0x78] sm:$0xff]
    %v405 = vld [vmem:[#allocation7 + $0x80] sm:$0xff]
    %v406 = vld [vmem:[#allocation7 + $0x88] sm:$0xff]
    %v407 = vld [vmem:[#allocation7 + $0x90] sm:$0xff]
    %v408 = vld [vmem:[#allocation7 + $0x98] sm:$0xff]
    %v409 = vld [vmem:[#allocation7 + $0xa0] sm:$0xff]
    %v410 = vld [vmem:[#allocation7 + $0xa8] sm:$0xff]
    %v411 = vld [vmem:[#allocation7 + $0xb0] sm:$0xff]
    %v412 = vld [vmem:[#allocation7 + $0xb8] sm:$0xff]
    %v413 = vld [vmem:[#allocation7 + $0xc0] sm:$0xff]
    %v414 = vld [vmem:[#allocation7 + $0xc8] sm:$0xff]
    %v415 = vld [vmem:[#allocation7 + $0xd0] sm:$0xff]
    %v416 = vld [vmem:[#allocation7 + $0xd8] sm:$0xff]
    %v417 = vld [vmem:[#allocation7 + $0xe0] sm:$0xff]
    %v418 = vld [vmem:[#allocation7 + $0xe8] sm:$0xff]
    %v419 = vld [vmem:[#allocation7 + $0xf0] sm:$0xff]
    %v420 = vld [vmem:[#allocation7 + $0xf8] sm:$0xff]
    %v421 = vld [vmem:[%s4] sm:$0x3]
    %v423 = vperm.slane %v421, 0
    %v424 = vperm.slane %v421, 1
    %427 = vmatpush.msra.mxu0 %v419
    %428 = vmatpush.msra.mxu0 %v417
    %429 = vmatpush.msra.mxu0 %v415
    %430 = vmatpush.msra.mxu0 %v413
    %431 = vmatpush.msra.mxu0 %v411
    %432 = vmatpush.msra.mxu0 %v409
    %433 = vmatpush.msra.mxu0 %v407
    %434 = vmatpush.msra.mxu0 %v405
    %435 = vmatpush.msra.mxu0 %v403
    %436 = vmatpush.msra.mxu0 %v401
    %437 = vmatpush.msra.mxu0 %v399
    %438 = vmatpush.msra.mxu0 %v397
    %439 = vmatpush.msra.mxu0 %v395
    %440 = vmatpush.msra.mxu0 %v393
    %441 = vmatpush.msra.mxu0 %v391
    %442 = vmatpush.msra.mxu0 %v389
    %443 = vmatmul.f32.gmra.mxu0 %v388
    %v444 = vpop.f32.mrf.mxu0
    %v445 = vadd.f32 %v423, %v444
    %446 = vdwg.mxu0
    %447 = vmatpush.msra.mxu0 %v420
    %448 = vmatpush.msra.mxu0 %v418
    %449 = vmatpush.msra.mxu0 %v416
    %450 = vmatpush.msra.mxu0 %v414
    %451 = vmatpush.msra.mxu0 %v412
    %452 = vmatpush.msra.mxu0 %v410
    %453 = vmatpush.msra.mxu0 %v408
    %454 = vmatpush.msra.mxu0 %v406
    %455 = vmatpush.msra.mxu0 %v404
    %456 = vmatpush.msra.mxu0 %v402
    %457 = vmatpush.msra.mxu0 %v400
    %458 = vmatpush.msra.mxu0 %v398
    %459 = vmatpush.msra.mxu0 %v396
    %460 = vmatpush.msra.mxu0 %v394
    %461 = vmatpush.msra.mxu0 %v392
    %462 = vmatpush.msra.mxu0 %v390
    %463 = vmatmul.f32.gmra.mxu0 %v388
    %v464 = vpop.f32.mrf.mxu0
    %v465 = vadd.f32 %v424, %v464
    %466 = vdwg.mxu0
    %v467 = vmax.f32 %v445, 0.0
    %v468 = vmax.f32 %v465, 0.0
    %v469 = vld [vmem:[#allocation8] sm:$0xff]
    %v470 = vld [vmem:[#allocation8 + $0x8] sm:$0xff]
    %v471 = vld [vmem:[#allocation8 + $0x10] sm:$0xff]
    %v472 = vld [vmem:[#allocation8 + $0x18] sm:$0xff]
    %v473 = vld [vmem:[#allocation8 + $0x20] sm:$0xff]
    %v474 = vld [vmem:[#allocation8 + $0x28] sm:$0xff]
    %v475 = vld [vmem:[#allocation8 + $0x30] sm:$0xff]
    %v476 = vld [vmem:[#allocation8 + $0x38] sm:$0xff]
    %v477 = vld [vmem:[#allocation8 + $0x40] sm:$0xff]
    %v478 = vld [vmem:[#allocation8 + $0x48] sm:$0xff]
    %v479 = vld [vmem:[#allocation8 + $0x50] sm:$0xff]
    %v480 = vld [vmem:[#allocation8 + $0x58] sm:$0xff]
    %v481 = vld [vmem:[#allocation8 + $0x60] sm:$0xff]
    %v482 = vld [vmem:[#allocation8 + $0x68] sm:$0xff]
    %v483 = vld [vmem:[#allocation8 + $0x70] sm:$0xff]
    %v484 = vld [vmem:[#allocation8 + $0x78] sm:$0xff]
    %v485 = vld [vmem:[#allocation8 + $0x80] sm:$0xff]
    %v486 = vld [vmem:[#allocation8 + $0x88] sm:$0xff]
    %v487 = vld [vmem:[#allocation8 + $0x90] sm:$0xff]
    %v488 = vld [vmem:[#allocation8 + $0x98] sm:$0xff]
    %v489 = vld [vmem:[#allocation8 + $0xa0] sm:$0xff]
    %v490 = vld [vmem:[#allocation8 + $0xa8] sm:$0xff]
    %v491 = vld [vmem:[#allocation8 + $0xb0] sm:$0xff]
    %v492 = vld [vmem:[#allocation8 + $0xb8] sm:$0xff]
    %v493 = vld [vmem:[#allocation8 + $0xc0] sm:$0xff]
    %v494 = vld [vmem:[#allocation8 + $0xc8] sm:$0xff]
    %v495 = vld [vmem:[#allocation8 + $0xd0] sm:$0xff]
    %v496 = vld [vmem:[#allocation8 + $0xd8] sm:$0xff]
    %v497 = vld [vmem:[#allocation8 + $0xe0] sm:$0xff]
    %v498 = vld [vmem:[#allocation8 + $0xe8] sm:$0xff]
    %v499 = vld [vmem:[#allocation8 + $0xf0] sm:$0xff]
    %v500 = vld [vmem:[#allocation8 + $0xf8] sm:$0xff]
    %v501 = vld [vmem:[%s6] sm:$0x1]
    %v503 = vperm.slane %v501, 0
    %505 = vmatpush.msra.mxu0 %v484
    %506 = vmatpush.msra.mxu0 %v483
    %507 = vmatpush.msra.mxu0 %v482
    %508 = vmatpush.msra.mxu0 %v481
    %509 = vmatpush.msra.mxu0 %v480
    %510 = vmatpush.msra.mxu0 %v479
    %511 = vmatpush.msra.mxu0 %v478
    %512 = vmatpush.msra.mxu0 %v477
    %513 = vmatpush.msra.mxu0 %v476
    %514 = vmatpush.msra.mxu0 %v475
    %515 = vmatpush.msra.mxu0 %v474
    %516 = vmatpush.msra.mxu0 %v473
    %517 = vmatpush.msra.mxu0 %v472
    %518 = vmatpush.msra.mxu0 %v471
    %519 = vmatpush.msra.mxu0 %v470
    %520 = vmatpush.msra.mxu0 %v469
    %521 = vmatmul.f32.gmra.mxu0 %v467
    %v522 = vpop.f32.mrf.mxu0
    %v523 = vadd.f32 %v503, %v522
    %524 = vdwg.mxu0
    %525 = vmatpush.msra.mxu0 %v500
    %526 = vmatpush.msra.mxu0 %v499
    %527 = vmatpush.msra.mxu0 %v498
    %528 = vmatpush.msra.mxu0 %v497
    %529 = vmatpush.msra.mxu0 %v496
    %530 = vmatpush.msra.mxu0 %v495
    %531 = vmatpush.msra.mxu0 %v494
    %532 = vmatpush.msra.mxu0 %v493
    %533 = vmatpush.msra.mxu0 %v492
    %534 = vmatpush.msra.mxu0 %v491
    %535 = vmatpush.msra.mxu0 %v490
    %536 = vmatpush.msra.mxu0 %v489
    %537 = vmatpush.msra.mxu0 %v488
    %538 = vmatpush.msra.mxu0 %v487
    %539 = vmatpush.msra.mxu0 %v486
    %540 = vmatpush.msra.mxu0 %v485
    %541 = vmatmul.f32.gmra.mxu0 %v468
    %v542 = vpop.f32.mrf.mxu0
    %v543 = vadd.f32 %v523, %v542
    %544 = vdwg.mxu0
    %545 = vst [vmem:[#allocation10] sm:$0xff] %v543
    // Predicated region
    $region46: #{tpu_custom_call.1} parent=1 // pred_check
      _
    $region47: #{tpu_custom_call.1} parent=1 // pred_check_branch
      %547 = sbr.rel (0) target = $region49
    $region48: #{tpu_custom_call.1} parent=1 // pred_region
      %549 = vsyncadd [#allocation4], 0
      %s551 = sshll.u32 [#allocation10], 4
      %s552 = int_to_ptr.vmem [resolvable:$true] %s551
      %s553 = sshll.u32 %s7, 4
      %s554 = int_to_ptr.hbm [resolvable:$true] %s553
      %556 = dma.vmem_to_hbm [thread:$0]  %s552, 128, %s554, [#allocation4]
    $region49: #{tpu_custom_call.1} parent=1 // pred_fallthru
      _
    // Predicated region
    $region50: #{tpu_custom_call.1} parent=1 // pred_check
      _
    $region51: #{tpu_custom_call.1} parent=1 // pred_check_branch
      %558 = sbr.rel (0) target = $region53
    $region52: #{tpu_custom_call.1} parent=1 // pred_region
      %560 = dma.done [#allocation4], 128
    $region53: #{tpu_custom_call.1} parent=1 // pred_fallthru
      _
    %561 = vsyncpa [#allocation3], 1
    %562 = vsyncpa [#allocation6], 1
    %563 = vsyncpa [#allocation9], 1
    %564 = vsyncpa [#allocation4], 1

</llo_original>
